<compile_context>
chip_gen: v7x
topology: tpu7x:2x2x1
jax: 0.10.0
libtpu: 0.0.40
codegen_flags: <defaults>
</compile_context>

<pallas_src>
import functools

import jax
import jax.numpy as jnp
from jax import lax
from jax.experimental import pallas as pl
from jax.experimental.pallas import tpu as pltpu


def _round_up(x, m):
    return ((x + m - 1) // m) * m


def _lista_kernel(y_ref, wT_ref, b_ref, sT_ref, z_ref, *, T):
    # B = y @ W^T + b   (bf16 MXU operands, f32 accumulation, f32 elementwise)
    B = (
        jnp.dot(
            y_ref[...].astype(jnp.bfloat16),
            wT_ref[...],
            preferred_element_type=jnp.float32,
        )
        + b_ref[...]
    )
    Z = jnp.maximum(B, 0.0)
    sT = sT_ref[...]  # resident (code_dim, code_dim) bf16 tile

    def body(_, Z):
        C = B + jnp.dot(
            Z.astype(jnp.bfloat16), sT, preferred_element_type=jnp.float32
        )
        return jnp.maximum(C, 0.0)

    # Fully unroll only for small T: S^T plus B and Z stay live across the whole
    # unrolled chain, so very large T would raise vreg pressure / spills.
    Z = lax.fori_loop(0, T, body, Z, unroll=(T <= 8))
    z_ref[...] = Z.astype(z_ref.dtype)


def prepare_lista_params(W, b, S, *, weights_dtype=jnp.bfloat16):
    """One-time parameter prep (hoisted out of the per-call path): transpose to
    row-major matmul layout and cast the weights for the MXU."""
    wT = jnp.asarray(W).T.astype(weights_dtype)                # (in_dim, code_dim)
    sT = jnp.asarray(S).T.astype(weights_dtype)                # (code_dim, code_dim)
    b_row = jnp.asarray(b).reshape(1, -1).astype(jnp.float32)  # (1, code_dim)
    return wT, b_row, sT


@functools.partial(jax.jit, static_argnames=("T", "batch_tile"))
def lista_encoder_forward(y, wT, b_row, sT, *, T, batch_tile=256):
    """y: (batch, n_channels, H, W) NCHW.  wT: (in_dim, code_dim) [bf16],
    b_row: (1, code_dim) f32, sT: (code_dim, code_dim) [bf16].
    Returns Z_final: (batch, code_dim) f32."""
    batch = y.shape[0]
    in_dim = y.shape[1] * y.shape[2] * y.shape[3]
    code_dim = wT.shape[1]

    # Flatten exactly like torch's .view(B, -1) on a contiguous NCHW tensor.
    y_flat = y.reshape(batch, in_dim).astype(jnp.float32)

    # Pad the batch so every MXU LHS tile is sublane-aligned (multiple of 8 for
    # f32) and the batch tile divides the padded batch evenly.
    if batch <= batch_tile:
        tb = max(8, _round_up(batch, 8))
        padded = tb
    else:
        tb = batch_tile
        padded = _round_up(batch, tb)
    if padded != batch:
        y_flat = jnp.pad(y_flat, ((0, padded - batch), (0, 0)))

    grid = (padded // tb,)
    kernel = functools.partial(_lista_kernel, T=T)

    # VMEM budget (worst case tb=256, in_dim=1024, code_dim=128):
    #   y tiles 2 x 1 MiB + out tiles 2 x 128 KiB (double-buffered)
    #   + wT 2 x 256 KiB bf16 + sT 2 x 32 KiB bf16 + live B/Z ~256 KiB
    # => well under the 32 MiB scoped default on every generation (incl. v7x).
    z_padded = pl.pallas_call(
        kernel,
        out_shape=jax.ShapeDtypeStruct((padded, code_dim), jnp.float32),
        grid_spec=pltpu.PrefetchScalarGridSpec(
            num_scalar_prefetch=0,
            grid=grid,
            in_specs=[
                pl.BlockSpec((tb, in_dim), lambda i: (i, 0)),          # y: batch-tiled
                pl.BlockSpec((in_dim, code_dim), lambda i: (0, 0)),    # W^T: resident
                pl.BlockSpec((1, code_dim), lambda i: (0, 0)),         # bias: resident
                pl.BlockSpec((code_dim, code_dim), lambda i: (0, 0)),  # S^T: resident
            ],
            out_specs=pl.BlockSpec((tb, code_dim), lambda i: (i, 0)),
        ),
        compiler_params=pltpu.CompilerParams(
            # Batch tiles are independent -> shard across both TCs on v7x.
            dimension_semantics=("parallel",),
        ),
    )(y_flat, wT, b_row, sT)

    return z_padded[:batch]


def lista_encoder_reference(y, W, b, S, *, T, weights_dtype=jnp.float32):
    """Pure-JAX reference mirroring the PyTorch forward.  With
    weights_dtype=bfloat16 it mirrors the kernel's mixed-precision path."""
    batch = y.shape[0]
    y_flat = y.reshape(batch, -1).astype(jnp.float32)
    wT = W.T.astype(weights_dtype)
    sT = S.T.astype(weights_dtype)
    B = (
        jnp.dot(
            y_flat.astype(weights_dtype), wT, preferred_element_type=jnp.float32
        )
        + b.astype(jnp.float32)
    )
    Z = jnp.maximum(B, 0.0)
    for _ in range(T):
        Z = jnp.maximum(
            B
            + jnp.dot(
                Z.astype(weights_dtype), sT, preferred_element_type=jnp.float32
            ),
            0.0,
        )
    return Z


if __name__ == "__main__":
    # Shapes consistent with the module: args.im_size=16 (no patch),
    # args.n_channels=4, args.code_dim=128, args.num_iter_LISTA=3.
    batch, n_channels, im_size = 2, 4, 16
    code_dim, T = 128, 3
    in_dim = n_channels * im_size * im_size

    key = jax.random.PRNGKey(0)
    k_y, k_w, k_s, k_y2 = jax.random.split(key, 4)

    y = jax.random.normal(k_y, (batch, n_channels, im_size, im_size), jnp.float32)
    # nn.Linear default init is kaiming-uniform; a deterministic uniform of the
    # same scale is fine for this synthetic test.  W.bias.data.fill_(0).
    bound_w = 1.0 / (in_dim ** 0.5)
    W = jax.random.uniform(k_w, (code_dim, in_dim), jnp.float32, -bound_w, bound_w)
    b = jnp.zeros((code_dim,), jnp.float32)
    bound_s = 1.0 / (code_dim ** 0.5)
    S = jax.random.uniform(k_s, (code_dim, code_dim), jnp.float32, -bound_s, bound_s)

    # One-time weight transpose + bf16 cast (hoisted out of the per-call path).
    wT, b_row, sT = prepare_lista_params(W, b, S)

    z = lista_encoder_forward(y, wT, b_row, sT, T=T)
    z = jax.block_until_ready(z)
    assert z.shape == (batch, code_dim)

    # Tight check vs. a reference that mirrors the kernel's mixed precision
    # (bf16 MXU operands, f32 accumulation / elementwise).
    z_ref_mixed = lista_encoder_reference(y, W, b, S, T=T, weights_dtype=jnp.bfloat16)
    err_mixed = float(jnp.max(jnp.abs(z - z_ref_mixed)))
    assert jnp.allclose(z, z_ref_mixed, atol=2e-3, rtol=2e-3), err_mixed

    # Loose sanity check vs. the pure-f32 PyTorch-equivalent semantics.
    z_ref_f32 = lista_encoder_reference(y, W, b, S, T=T, weights_dtype=jnp.float32)
    err_f32 = float(jnp.max(jnp.abs(z - z_ref_f32)))
    assert jnp.allclose(z, z_ref_f32, atol=5e-2, rtol=5e-2), err_f32

    # Exercise the padded / multi-tile path (grid > 1, batch not a tile multiple).
    batch2 = 260
    y2 = jax.random.normal(k_y2, (batch2, n_channels, im_size, im_size), jnp.float32)
    z2 = jax.block_until_ready(lista_encoder_forward(y2, wT, b_row, sT, T=T))
    z2_ref = lista_encoder_reference(y2, W, b, S, T=T, weights_dtype=jnp.bfloat16)
    assert z2.shape == (batch2, code_dim)
    assert jnp.allclose(z2, z2_ref, atol=2e-3, rtol=2e-3), float(
        jnp.max(jnp.abs(z2 - z2_ref))
    )

    print("KERNEL_OK")
</pallas_src>

<mosaic_0001>
module attributes {stable_mosaic.version = 11 : i64} {
  func.func @_lista_kernel(%arg0: i32, %arg1: memref<8x1024xf32, #tpu.memory_space<vmem>>, %arg2: memref<1024x128xbf16, #tpu.memory_space<vmem>>, %arg3: memref<1x128xf32, #tpu.memory_space<vmem>>, %arg4: memref<128x128xbf16, #tpu.memory_space<vmem>>, %arg5: memref<8x128xf32, #tpu.memory_space<vmem>>) attributes {dimension_semantics = [#tpu.dimension_semantics<parallel>], iteration_bounds = array<i64: 1>, scalar_prefetch = 0 : i64, scratch_operands = 0 : i64, tpu.core_type = #tpu.core_type<tc>, window_params = [{transform_indices = @transform_0, window_bounds = array<i64: 8, 1024>}, {pipeline_mode = #tpu.pipeline_mode<synchronous>, transform_indices = @transform_1, window_bounds = array<i64: 1024, 128>}, {pipeline_mode = #tpu.pipeline_mode<synchronous>, transform_indices = @transform_2, window_bounds = array<i64: 1, 128>}, {pipeline_mode = #tpu.pipeline_mode<synchronous>, transform_indices = @transform_3, window_bounds = array<i64: 128, 128>}, {transform_indices = @transform_4, window_bounds = array<i64: 8, 128>}]} {
    %c0 = arith.constant 0 : index
    %c0_0 = arith.constant 0 : index
    %0 = vector.load %arg1[%c0, %c0_0] : memref<8x1024xf32, #tpu.memory_space<vmem>>, vector<8x1024xf32>
    %1 = arith.truncf %0 : vector<8x1024xf32> to vector<8x1024xbf16>
    %c0_1 = arith.constant 0 : index
    %c0_2 = arith.constant 0 : index
    %2 = vector.load %arg2[%c0_1, %c0_2] : memref<1024x128xbf16, #tpu.memory_space<vmem>>, vector<1024x128xbf16>
    %cst = arith.constant dense<0.000000e+00> : vector<8x128xf32>
    %3 = tpu.matmul %1, %2, %cst {dimension_numbers = #tpu.dot_dimension_numbers<[1], [0], [0], [1], [0, 0, 1, 1], [], []>} : vector<8x1024xbf16>, vector<1024x128xbf16>, vector<8x128xf32> -> vector<8x128xf32>
    %c0_3 = arith.constant 0 : index
    %c0_4 = arith.constant 0 : index
    %4 = vector.load %arg3[%c0_3, %c0_4] : memref<1x128xf32, #tpu.memory_space<vmem>>, vector<1x128xf32>
    %5 = vector.broadcast %4 : vector<1x128xf32> to vector<8x128xf32>
    %6 = arith.addf %3, %5 : vector<8x128xf32>
    %cst_5 = arith.constant 0.000000e+00 : f32
    %7 = vector.broadcast %cst_5 : f32 to vector<8x128xf32>
    %8 = arith.maximumf %6, %7 : vector<8x128xf32>
    %c0_6 = arith.constant 0 : index
    %c0_7 = arith.constant 0 : index
    %9 = vector.load %arg4[%c0_6, %c0_7] : memref<128x128xbf16, #tpu.memory_space<vmem>>, vector<128x128xbf16>
    %c0_i32 = arith.constant 0 : i32
    %10 = arith.truncf %8 : vector<8x128xf32> to vector<8x128xbf16>
    %cst_8 = arith.constant dense<0.000000e+00> : vector<8x128xf32>
    %11 = tpu.matmul %10, %9, %cst_8 {dimension_numbers = #tpu.dot_dimension_numbers<[1], [0], [0], [1], [0, 0, 1, 1], [], []>} : vector<8x128xbf16>, vector<128x128xbf16>, vector<8x128xf32> -> vector<8x128xf32>
    %12 = arith.addf %6, %11 : vector<8x128xf32>
    %cst_9 = arith.constant 0.000000e+00 : f32
    %13 = vector.broadcast %cst_9 : f32 to vector<8x128xf32>
    %14 = arith.maximumf %12, %13 : vector<8x128xf32>
    %c1_i32 = arith.constant 1 : i32
    %15 = arith.truncf %14 : vector<8x128xf32> to vector<8x128xbf16>
    %cst_10 = arith.constant dense<0.000000e+00> : vector<8x128xf32>
    %16 = tpu.matmul %15, %9, %cst_10 {dimension_numbers = #tpu.dot_dimension_numbers<[1], [0], [0], [1], [0, 0, 1, 1], [], []>} : vector<8x128xbf16>, vector<128x128xbf16>, vector<8x128xf32> -> vector<8x128xf32>
    %17 = arith.addf %6, %16 : vector<8x128xf32>
    %cst_11 = arith.constant 0.000000e+00 : f32
    %18 = vector.broadcast %cst_11 : f32 to vector<8x128xf32>
    %19 = arith.maximumf %17, %18 : vector<8x128xf32>
    %c2_i32 = arith.constant 2 : i32
    %20 = arith.truncf %19 : vector<8x128xf32> to vector<8x128xbf16>
    %cst_12 = arith.constant dense<0.000000e+00> : vector<8x128xf32>
    %21 = tpu.matmul %20, %9, %cst_12 {dimension_numbers = #tpu.dot_dimension_numbers<[1], [0], [0], [1], [0, 0, 1, 1], [], []>} : vector<8x128xbf16>, vector<128x128xbf16>, vector<8x128xf32> -> vector<8x128xf32>
    %22 = arith.addf %6, %21 : vector<8x128xf32>
    %cst_13 = arith.constant 0.000000e+00 : f32
    %23 = vector.broadcast %cst_13 : f32 to vector<8x128xf32>
    %24 = arith.maximumf %22, %23 : vector<8x128xf32>
    %c0_14 = arith.constant 0 : index
    %c0_15 = arith.constant 0 : index
    %25 = vector.load %arg5[%c0_14, %c0_15] : memref<8x128xf32, #tpu.memory_space<vmem>>, vector<8x128xf32>
    tpu.vector_store %arg5[%c0_14, %c0_15], %24 {strides = array<i32>} : memref<8x128xf32, #tpu.memory_space<vmem>>, vector<8x128xf32>,
    return
  }
  func.func @transform_0(%arg0: i32) -> (i32, i32) {
    %c0_i32 = arith.constant 0 : i32
    %c0_i32_0 = arith.constant 0 : i32
    return %arg0, %c0_i32 : i32, i32
  }
  func.func @transform_1(%arg0: i32) -> (i32, i32) {
    %c0_i32 = arith.constant 0 : i32
    %c0_i32_0 = arith.constant 0 : i32
    %c0_i32_1 = arith.constant 0 : i32
    return %c0_i32, %c0_i32_0 : i32, i32
  }
  func.func @transform_2(%arg0: i32) -> (i32, i32) {
    %c0_i32 = arith.constant 0 : i32
    %c0_i32_0 = arith.constant 0 : i32
    %c0_i32_1 = arith.constant 0 : i32
    return %c0_i32, %c0_i32_0 : i32, i32
  }
  func.func @transform_3(%arg0: i32) -> (i32, i32) {
    %c0_i32 = arith.constant 0 : i32
    %c0_i32_0 = arith.constant 0 : i32
    %c0_i32_1 = arith.constant 0 : i32
    return %c0_i32, %c0_i32_0 : i32, i32
  }
  func.func @transform_4(%arg0: i32) -> (i32, i32) {
    %c0_i32 = arith.constant 0 : i32
    %c0_i32_0 = arith.constant 0 : i32
    return %arg0, %c0_i32 : i32, i32
  }
}

</mosaic_0001>

<llo_original>
// kernel: lista_encoder_forward.1
$region0: #{lista_encoder_forward.1}
  #allocation0 [shape = 'u32[]', space=smem, size = 0x4, offset = 0x4, fixed_abs, tag = 'smem constant byte address 0x4 - core index']
  #allocation1 [shape = 'u32[144,128]{1,0:T(1,128)}', space=vmem, size = 0x12000, scoped, tag = 'internal scratch']
  %s0 = inlined_call_operand.vmem [shape: f32[8,1024], index: 0, kind: input, shape index: {}]
  %s1 = inlined_call_operand.hbm [shape: bf16[1024,128], index: 1, kind: input, shape index: {}]
  %s2 = inlined_call_operand.vmem [shape: f32[1,128], index: 2, kind: input, shape index: {}]
  %s3 = inlined_call_operand.vmem [shape: bf16[128,128], index: 3, kind: input, shape index: {}]
  %s4 = inlined_call_operand.vmem [shape: f32[8,128], index: 4, kind: output, shape index: {}]
  %s5 = sld [smem:[#allocation0]]
  $region30: #{lista_encoder_forward.1} parent=0
    _
  %s7 = ssub.s32 1, %s5
  %s8 = scalar_select 0, %s7, %s5
  $region1: #{lista_encoder_forward.1} parent=0
    #allocation2 [shape = 'u8[262144]{0}', space=vmem, size = 0x40000, scoped, tag = 'input window, operand 1, single buffered']
    #allocation3 [shape = 's32[1]{0}', space=sflag, size = 0x4, scoped, tag = 'scoped memory for lista_encoder_forward.1']
    %9 = vsyncpa [#allocation3], 0
    // Predicated region
    $region2: #{lista_encoder_forward.1} parent=1 // pred_check
      _
    $region3: #{lista_encoder_forward.1} parent=1 // pred_check_branch
      %11 = sbr.rel (0) target = $region5
    $region4: #{lista_encoder_forward.1} parent=1 // pred_region
      _
    $region5: #{lista_encoder_forward.1} parent=1 // pred_fallthru
      _
    // Predicated region
    $region6: #{lista_encoder_forward.1} parent=1 // pred_check
      _
    $region7: #{lista_encoder_forward.1} parent=1 // pred_check_branch
      %13 = sbr.rel (0) target = $region9
    $region8: #{lista_encoder_forward.1} parent=1 // pred_region
      %s15 = ssub.s32 8192, 8192
      %16 = vsyncadd [#allocation3], %s15
      %s17 = sshll.u32 [#allocation2], 4
      %s18 = int_to_ptr.vmem [resolvable:$true] %s17
      %23 = dma.hbm_to_vmem [thread:$0]  %s1, 8192, %s18, [#allocation3], 64, 64, 4
    $region9: #{lista_encoder_forward.1} parent=1 // pred_fallthru
      _
    // Predicated region
    $region10: #{lista_encoder_forward.1} parent=1 // pred_check
      _
    $region11: #{lista_encoder_forward.1} parent=1 // pred_check_branch
      %25 = sbr.rel (0) target = $region13
    $region12: #{lista_encoder_forward.1} parent=1 // pred_region
      _
    $region13: #{lista_encoder_forward.1} parent=1 // pred_fallthru
      _
    // Predicated region
    $region14: #{lista_encoder_forward.1} parent=1 // pred_check
      _
    $region15: #{lista_encoder_forward.1} parent=1 // pred_check_branch
      %27 = sbr.rel (0) target = $region17
    $region16: #{lista_encoder_forward.1} parent=1 // pred_region
      _
    $region17: #{lista_encoder_forward.1} parent=1 // pred_fallthru
      _
    // Predicated region
    $region18: #{lista_encoder_forward.1} parent=1 // pred_check
      _
    $region19: #{lista_encoder_forward.1} parent=1 // pred_check_branch
      %29 = sbr.rel (0) target = $region21
    $region20: #{lista_encoder_forward.1} parent=1 // pred_region
      %30 = dma.done [#allocation3], 8192
    $region21: #{lista_encoder_forward.1} parent=1 // pred_fallthru
      _
    %v32 = vld [vmem:[%s0] sm:$0xff]
    %v33 = vld [vmem:[%s0 + $0x8] sm:$0xff]
    %v34 = vld [vmem:[%s0 + $0x10] sm:$0xff]
    %v35 = vld [vmem:[%s0 + $0x18] sm:$0xff]
    %v36 = vld [vmem:[%s0 + $0x20] sm:$0xff]
    %v37 = vld [vmem:[%s0 + $0x28] sm:$0xff]
    %v38 = vld [vmem:[%s0 + $0x30] sm:$0xff]
    %v39 = vld [vmem:[%s0 + $0x38] sm:$0xff]
    %v40 = vpack.c.bf16 %v32, %v32
    %v41 = vpack.c.bf16 %v33, %v33
    %v42 = vpack.c.bf16 %v34, %v34
    %v43 = vpack.c.bf16 %v35, %v35
    %v44 = vpack.c.bf16 %v36, %v36
    %v45 = vpack.c.bf16 %v37, %v37
    %v46 = vpack.c.bf16 %v38, %v38
    %v47 = vpack.c.bf16 %v39, %v39
    %v48 = vld [vmem:[#allocation2] sm:$0xf]
    %v49 = vld [vmem:[#allocation2 + $0x4] sm:$0xf]
    %v50 = vld [vmem:[#allocation2 + $0x8] sm:$0xf]
    %v51 = vld [vmem:[#allocation2 + $0xc] sm:$0xf]
    %v52 = vld [vmem:[#allocation2 + $0x10] sm:$0xf]
    %v53 = vld [vmem:[#allocation2 + $0x14] sm:$0xf]
    %v54 = vld [vmem:[#allocation2 + $0x18] sm:$0xf]
    %v55 = vld [vmem:[#allocation2 + $0x1c] sm:$0xf]
    %v56 = vld [vmem:[#allocation2 + $0x20] sm:$0xf]
    %v57 = vld [vmem:[#allocation2 + $0x24] sm:$0xf]
    %v58 = vld [vmem:[#allocation2 + $0x28] sm:$0xf]
    %v59 = vld [vmem:[#allocation2 + $0x2c] sm:$0xf]
    %v60 = vld [vmem:[#allocation2 + $0x30] sm:$0xf]
    %v61 = vld [vmem:[#allocation2 + $0x34] sm:$0xf]
    %v62 = vld [vmem:[#allocation2 + $0x38] sm:$0xf]
    %v63 = vld [vmem:[#allocation2 + $0x3c] sm:$0xf]
    %v64 = vld [vmem:[#allocation2 + $0x40] sm:$0xf]
    %v65 = vld [vmem:[#allocation2 + $0x44] sm:$0xf]
    %v66 = vld [vmem:[#allocation2 + $0x48] sm:$0xf]
    %v67 = vld [vmem:[#allocation2 + $0x4c] sm:$0xf]
    %v68 = vld [vmem:[#allocation2 + $0x50] sm:$0xf]
    %v69 = vld [vmem:[#allocation2 + $0x54] sm:$0xf]
    %v70 = vld [vmem:[#allocation2 + $0x58] sm:$0xf]
    %v71 = vld [vmem:[#allocation2 + $0x5c] sm:$0xf]
    %v72 = vld [vmem:[#allocation2 + $0x60] sm:$0xf]
    %v73 = vld [vmem:[#allocation2 + $0x64] sm:$0xf]
    %v74 = vld [vmem:[#allocation2 + $0x68] sm:$0xf]
    %v75 = vld [vmem:[#allocation2 + $0x6c] sm:$0xf]
    %v76 = vld [vmem:[#allocation2 + $0x70] sm:$0xf]
    %v77 = vld [vmem:[#allocation2 + $0x74] sm:$0xf]
    %v78 = vld [vmem:[#allocation2 + $0x78] sm:$0xf]
    %v79 = vld [vmem:[#allocation2 + $0x7c] sm:$0xf]
    %v80 = vld [vmem:[#allocation2 + $0x80] sm:$0xf]
    %v81 = vld [vmem:[#allocation2 + $0x84] sm:$0xf]
    %v82 = vld [vmem:[#allocation2 + $0x88] sm:$0xf]
    %v83 = vld [vmem:[#allocation2 + $0x8c] sm:$0xf]
    %v84 = vld [vmem:[#allocation2 + $0x90] sm:$0xf]
    %v85 = vld [vmem:[#allocation2 + $0x94] sm:$0xf]
    %v86 = vld [vmem:[#allocation2 + $0x98] sm:$0xf]
    %v87 = vld [vmem:[#allocation2 + $0x9c] sm:$0xf]
    %v88 = vld [vmem:[#allocation2 + $0xa0] sm:$0xf]
    %v89 = vld [vmem:[#allocation2 + $0xa4] sm:$0xf]
    %v90 = vld [vmem:[#allocation2 + $0xa8] sm:$0xf]
    %v91 = vld [vmem:[#allocation2 + $0xac] sm:$0xf]
    %v92 = vld [vmem:[#allocation2 + $0xb0] sm:$0xf]
    %v93 = vld [vmem:[#allocation2 + $0xb4] sm:$0xf]
    %v94 = vld [vmem:[#allocation2 + $0xb8] sm:$0xf]
    %v95 = vld [vmem:[#allocation2 + $0xbc] sm:$0xf]
    %v96 = vld [vmem:[#allocation2 + $0xc0] sm:$0xf]
    %v97 = vld [vmem:[#allocation2 + $0xc4] sm:$0xf]
    %v98 = vld [vmem:[#allocation2 + $0xc8] sm:$0xf]
    %v99 = vld [vmem:[#allocation2 + $0xcc] sm:$0xf]
    %v100 = vld [vmem:[#allocation2 + $0xd0] sm:$0xf]
    %v101 = vld [vmem:[#allocation2 + $0xd4] sm:$0xf]
    %v102 = vld [vmem:[#allocation2 + $0xd8] sm:$0xf]
    %v103 = vld [vmem:[#allocation2 + $0xdc] sm:$0xf]
    %v104 = vld [vmem:[#allocation2 + $0xe0] sm:$0xf]
    %v105 = vld [vmem:[#allocation2 + $0xe4] sm:$0xf]
    %v106 = vld [vmem:[#allocation2 + $0xe8] sm:$0xf]
    %v107 = vld [vmem:[#allocation2 + $0xec] sm:$0xf]
    %v108 = vld [vmem:[#allocation2 + $0xf0] sm:$0xf]
    %v109 = vld [vmem:[#allocation2 + $0xf4] sm:$0xf]
    %v110 = vld [vmem:[#allocation2 + $0xf8] sm:$0xf]
    %v111 = vld [vmem:[#allocation2 + $0xfc] sm:$0xf]
    %v112 = vld [vmem:[#allocation2 + $0x100] sm:$0xf]
    %v113 = vld [vmem:[#allocation2 + $0x104] sm:$0xf]
    %v114 = vld [vmem:[#allocation2 + $0x108] sm:$0xf]
    %v115 = vld [vmem:[#allocation2 + $0x10c] sm:$0xf]
    %v116 = vld [vmem:[#allocation2 + $0x110] sm:$0xf]
    %v117 = vld [vmem:[#allocation2 + $0x114] sm:$0xf]
    %v118 = vld [vmem:[#allocation2 + $0x118] sm:$0xf]
    %v119 = vld [vmem:[#allocation2 + $0x11c] sm:$0xf]
    %v120 = vld [vmem:[#allocation2 + $0x120] sm:$0xf]
    %v121 = vld [vmem:[#allocation2 + $0x124] sm:$0xf]
    %v122 = vld [vmem:[#allocation2 + $0x128] sm:$0xf]
    %v123 = vld [vmem:[#allocation2 + $0x12c] sm:$0xf]
    %v124 = vld [vmem:[#allocation2 + $0x130] sm:$0xf]
    %v125 = vld [vmem:[#allocation2 + $0x134] sm:$0xf]
    %v126 = vld [vmem:[#allocation2 + $0x138] sm:$0xf]
    %v127 = vld [vmem:[#allocation2 + $0x13c] sm:$0xf]
    %v128 = vld [vmem:[#allocation2 + $0x140] sm:$0xf]
    %v129 = vld [vmem:[#allocation2 + $0x144] sm:$0xf]
    %v130 = vld [vmem:[#allocation2 + $0x148] sm:$0xf]
    %v131 = vld [vmem:[#allocation2 + $0x14c] sm:$0xf]
    %v132 = vld [vmem:[#allocation2 + $0x150] sm:$0xf]
    %v133 = vld [vmem:[#allocation2 + $0x154] sm:$0xf]
    %v134 = vld [vmem:[#allocation2 + $0x158] sm:$0xf]
    %v135 = vld [vmem:[#allocation2 + $0x15c] sm:$0xf]
    %v136 = vld [vmem:[#allocation2 + $0x160] sm:$0xf]
    %v137 = vld [vmem:[#allocation2 + $0x164] sm:$0xf]
    %v138 = vld [vmem:[#allocation2 + $0x168] sm:$0xf]
    %v139 = vld [vmem:[#allocation2 + $0x16c] sm:$0xf]
    %v140 = vld [vmem:[#allocation2 + $0x170] sm:$0xf]
    %v141 = vld [vmem:[#allocation2 + $0x174] sm:$0xf]
    %v142 = vld [vmem:[#allocation2 + $0x178] sm:$0xf]
    %v143 = vld [vmem:[#allocation2 + $0x17c] sm:$0xf]
    %v144 = vld [vmem:[#allocation2 + $0x180] sm:$0xf]
    %v145 = vld [vmem:[#allocation2 + $0x184] sm:$0xf]
    %v146 = vld [vmem:[#allocation2 + $0x188] sm:$0xf]
    %v147 = vld [vmem:[#allocation2 + $0x18c] sm:$0xf]
    %v148 = vld [vmem:[#allocation2 + $0x190] sm:$0xf]
    %v149 = vld [vmem:[#allocation2 + $0x194] sm:$0xf]
    %v150 = vld [vmem:[#allocation2 + $0x198] sm:$0xf]
    %v151 = vld [vmem:[#allocation2 + $0x19c] sm:$0xf]
    %v152 = vld [vmem:[#allocation2 + $0x1a0] sm:$0xf]
    %v153 = vld [vmem:[#allocation2 + $0x1a4] sm:$0xf]
    %v154 = vld [vmem:[#allocation2 + $0x1a8] sm:$0xf]
    %v155 = vld [vmem:[#allocation2 + $0x1ac] sm:$0xf]
    %v156 = vld [vmem:[#allocation2 + $0x1b0] sm:$0xf]
    %v157 = vld [vmem:[#allocation2 + $0x1b4] sm:$0xf]
    %v158 = vld [vmem:[#allocation2 + $0x1b8] sm:$0xf]
    %v159 = vld [vmem:[#allocation2 + $0x1bc] sm:$0xf]
    %v160 = vld [vmem:[#allocation2 + $0x1c0] sm:$0xf]
    %v161 = vld [vmem:[#allocation2 + $0x1c4] sm:$0xf]
    %v162 = vld [vmem:[#allocation2 + $0x1c8] sm:$0xf]
    %v163 = vld [vmem:[#allocation2 + $0x1cc] sm:$0xf]
    %v164 = vld [vmem:[#allocation2 + $0x1d0] sm:$0xf]
    %v165 = vld [vmem:[#allocation2 + $0x1d4] sm:$0xf]
    %v166 = vld [vmem:[#allocation2 + $0x1d8] sm:$0xf]
    %v167 = vld [vmem:[#allocation2 + $0x1dc] sm:$0xf]
    %v168 = vld [vmem:[#allocation2 + $0x1e0] sm:$0xf]
    %v169 = vld [vmem:[#allocation2 + $0x1e4] sm:$0xf]
    %v170 = vld [vmem:[#allocation2 + $0x1e8] sm:$0xf]
    %v171 = vld [vmem:[#allocation2 + $0x1ec] sm:$0xf]
    %v172 = vld [vmem:[#allocation2 + $0x1f0] sm:$0xf]
    %v173 = vld [vmem:[#allocation2 + $0x1f4] sm:$0xf]
    %v174 = vld [vmem:[#allocation2 + $0x1f8] sm:$0xf]
    %v175 = vld [vmem:[#allocation2 + $0x1fc] sm:$0xf]
    %v176 = vld [vmem:[%s2] sm:$0x1]
    %v178 = vlaneseq
    %v179 = vshrl.u32 %v178, 7
    %v180 = vsub.s32 0, %v179
    %v181 = vrot.slane %v176, %v180
    %v311 = vunpack.c.l.b16 %v48
    %v312 = vunpack.c.l.b16 %v49
    %v313 = vunpack.c.l.b16 %v50
    %v314 = vunpack.c.l.b16 %v51
    %v315 = vunpack.c.l.b16 %v52
    %v316 = vunpack.c.l.b16 %v53
    %v317 = vunpack.c.l.b16 %v54
    %v318 = vunpack.c.l.b16 %v55
    %v319 = vunpack.c.l.b16 %v56
    %v320 = vunpack.c.l.b16 %v57
    %v321 = vunpack.c.l.b16 %v58
    %v322 = vunpack.c.l.b16 %v59
    %v323 = vunpack.c.l.b16 %v60
    %v324 = vunpack.c.l.b16 %v61
    %v325 = vunpack.c.l.b16 %v62
    %v326 = vunpack.c.l.b16 %v63
    %v327 = vunpack.c.l.b16 %v64
    %v328 = vunpack.c.l.b16 %v65
    %v329 = vunpack.c.l.b16 %v66
    %v330 = vunpack.c.l.b16 %v67
    %v331 = vunpack.c.l.b16 %v68
    %v332 = vunpack.c.l.b16 %v69
    %v333 = vunpack.c.l.b16 %v70
    %v334 = vunpack.c.l.b16 %v71
    %v335 = vunpack.c.l.b16 %v72
    %v336 = vunpack.c.l.b16 %v73
    %v337 = vunpack.c.l.b16 %v74
    %v338 = vunpack.c.l.b16 %v75
    %v339 = vunpack.c.l.b16 %v76
    %v340 = vunpack.c.l.b16 %v77
    %v341 = vunpack.c.l.b16 %v78
    %v342 = vunpack.c.l.b16 %v79
    %v343 = vunpack.c.l.b16 %v80
    %v344 = vunpack.c.l.b16 %v81
    %v345 = vunpack.c.l.b16 %v82
    %v346 = vunpack.c.l.b16 %v83
    %v347 = vunpack.c.l.b16 %v84
    %v348 = vunpack.c.l.b16 %v85
    %v349 = vunpack.c.l.b16 %v86
    %v350 = vunpack.c.l.b16 %v87
    %v351 = vunpack.c.l.b16 %v88
    %v352 = vunpack.c.l.b16 %v89
    %v353 = vunpack.c.l.b16 %v90
    %v354 = vunpack.c.l.b16 %v91
    %v355 = vunpack.c.l.b16 %v92
    %v356 = vunpack.c.l.b16 %v93
    %v357 = vunpack.c.l.b16 %v94
    %v358 = vunpack.c.l.b16 %v95
    %v359 = vunpack.c.l.b16 %v96
    %v360 = vunpack.c.l.b16 %v97
    %v361 = vunpack.c.l.b16 %v98
    %v362 = vunpack.c.l.b16 %v99
    %v363 = vunpack.c.l.b16 %v100
    %v364 = vunpack.c.l.b16 %v101
    %v365 = vunpack.c.l.b16 %v102
    %v366 = vunpack.c.l.b16 %v103
    %v367 = vunpack.c.l.b16 %v104
    %v368 = vunpack.c.l.b16 %v105
    %v369 = vunpack.c.l.b16 %v106
    %v370 = vunpack.c.l.b16 %v107
    %v371 = vunpack.c.l.b16 %v108
    %v372 = vunpack.c.l.b16 %v109
    %v373 = vunpack.c.l.b16 %v110
    %v374 = vunpack.c.l.b16 %v111
    %v375 = vunpack.c.l.b16 %v112
    %v376 = vunpack.c.l.b16 %v113
    %v377 = vunpack.c.l.b16 %v114
    %v378 = vunpack.c.l.b16 %v115
    %v379 = vunpack.c.l.b16 %v116
    %v380 = vunpack.c.l.b16 %v117
    %v381 = vunpack.c.l.b16 %v118
    %v382 = vunpack.c.l.b16 %v119
    %v383 = vunpack.c.l.b16 %v120
    %v384 = vunpack.c.l.b16 %v121
    %v385 = vunpack.c.l.b16 %v122
    %v386 = vunpack.c.l.b16 %v123
    %v387 = vunpack.c.l.b16 %v124
    %v388 = vunpack.c.l.b16 %v125
    %v389 = vunpack.c.l.b16 %v126
    %v390 = vunpack.c.l.b16 %v127
    %v391 = vunpack.c.l.b16 %v128
    %v392 = vunpack.c.l.b16 %v129
    %v393 = vunpack.c.l.b16 %v130
    %v394 = vunpack.c.l.b16 %v131
    %v395 = vunpack.c.l.b16 %v132
    %v396 = vunpack.c.l.b16 %v133
    %v397 = vunpack.c.l.b16 %v134
    %v398 = vunpack.c.l.b16 %v135
    %v399 = vunpack.c.l.b16 %v136
    %v400 = vunpack.c.l.b16 %v137
    %v401 = vunpack.c.l.b16 %v138
    %v402 = vunpack.c.l.b16 %v139
    %v403 = vunpack.c.l.b16 %v140
    %v404 = vunpack.c.l.b16 %v141
    %v405 = vunpack.c.l.b16 %v142
    %v406 = vunpack.c.l.b16 %v143
    %v407 = vunpack.c.l.b16 %v144
    %v408 = vunpack.c.l.b16 %v145
    %v409 = vunpack.c.l.b16 %v146
    %v410 = vunpack.c.l.b16 %v147
    %v411 = vunpack.c.l.b16 %v148
    %v412 = vunpack.c.l.b16 %v149
    %v413 = vunpack.c.l.b16 %v150
    %v414 = vunpack.c.l.b16 %v151
    %v415 = vunpack.c.l.b16 %v152
    %v416 = vunpack.c.l.b16 %v153
    %v417 = vunpack.c.l.b16 %v154
    %v418 = vunpack.c.l.b16 %v155
    %v419 = vunpack.c.l.b16 %v156
    %v420 = vunpack.c.l.b16 %v157
    %v421 = vunpack.c.l.b16 %v158
    %v422 = vunpack.c.l.b16 %v159
    %v423 = vunpack.c.l.b16 %v160
    %v424 = vunpack.c.l.b16 %v161
    %v425 = vunpack.c.l.b16 %v162
    %v426 = vunpack.c.l.b16 %v163
    %v427 = vunpack.c.l.b16 %v164
    %v428 = vunpack.c.l.b16 %v165
    %v429 = vunpack.c.l.b16 %v166
    %v430 = vunpack.c.l.b16 %v167
    %v431 = vunpack.c.l.b16 %v168
    %v432 = vunpack.c.l.b16 %v169
    %v433 = vunpack.c.l.b16 %v170
    %v434 = vunpack.c.l.b16 %v171
    %v435 = vunpack.c.l.b16 %v172
    %v436 = vunpack.c.l.b16 %v173
    %v437 = vunpack.c.l.b16 %v174
    %v438 = vunpack.c.l.b16 %v175
    %v439 = vpack.c.b16 %v312, %v311
    %v440 = vpack.c.b16 %v314, %v313
    %v441 = vpack.c.b16 %v316, %v315
    %v442 = vpack.c.b16 %v318, %v317
    %v443 = vpack.c.b16 %v320, %v319
    %v444 = vpack.c.b16 %v322, %v321
    %v445 = vpack.c.b16 %v324, %v323
    %v446 = vpack.c.b16 %v326, %v325
    %v447 = vpack.c.b16 %v328, %v327
    %v448 = vpack.c.b16 %v330, %v329
    %v449 = vpack.c.b16 %v332, %v331
    %v450 = vpack.c.b16 %v334, %v333
    %v451 = vpack.c.b16 %v336, %v335
    %v452 = vpack.c.b16 %v338, %v337
    %v453 = vpack.c.b16 %v340, %v339
    %v454 = vpack.c.b16 %v342, %v341
    %v455 = vpack.c.b16 %v344, %v343
    %v456 = vpack.c.b16 %v346, %v345
    %v457 = vpack.c.b16 %v348, %v347
    %v458 = vpack.c.b16 %v350, %v349
    %v459 = vpack.c.b16 %v352, %v351
    %v460 = vpack.c.b16 %v354, %v353
    %v461 = vpack.c.b16 %v356, %v355
    %v462 = vpack.c.b16 %v358, %v357
    %v463 = vpack.c.b16 %v360, %v359
    %v464 = vpack.c.b16 %v362, %v361
    %v465 = vpack.c.b16 %v364, %v363
    %v466 = vpack.c.b16 %v366, %v365
    %v467 = vpack.c.b16 %v368, %v367
    %v468 = vpack.c.b16 %v370, %v369
    %v469 = vpack.c.b16 %v372, %v371
    %v470 = vpack.c.b16 %v374, %v373
    %v471 = vpack.c.b16 %v376, %v375
    %v472 = vpack.c.b16 %v378, %v377
    %v473 = vpack.c.b16 %v380, %v379
    %v474 = vpack.c.b16 %v382, %v381
    %v475 = vpack.c.b16 %v384, %v383
    %v476 = vpack.c.b16 %v386, %v385
    %v477 = vpack.c.b16 %v388, %v387
    %v478 = vpack.c.b16 %v390, %v389
    %v479 = vpack.c.b16 %v392, %v391
    %v480 = vpack.c.b16 %v394, %v393
    %v481 = vpack.c.b16 %v396, %v395
    %v482 = vpack.c.b16 %v398, %v397
    %v483 = vpack.c.b16 %v400, %v399
    %v484 = vpack.c.b16 %v402, %v401
    %v485 = vpack.c.b16 %v404, %v403
    %v486 = vpack.c.b16 %v406, %v405
    %v487 = vpack.c.b16 %v408, %v407
    %v488 = vpack.c.b16 %v410, %v409
    %v489 = vpack.c.b16 %v412, %v411
    %v490 = vpack.c.b16 %v414, %v413
    %v491 = vpack.c.b16 %v416, %v415
    %v492 = vpack.c.b16 %v418, %v417
    %v493 = vpack.c.b16 %v420, %v419
    %v494 = vpack.c.b16 %v422, %v421
    %v495 = vpack.c.b16 %v424, %v423
    %v496 = vpack.c.b16 %v426, %v425
    %v497 = vpack.c.b16 %v428, %v427
    %v498 = vpack.c.b16 %v430, %v429
    %v499 = vpack.c.b16 %v432, %v431
    %v500 = vpack.c.b16 %v434, %v433
    %v501 = vpack.c.b16 %v436, %v435
    %v502 = vpack.c.b16 %v438, %v437
    %567 = vmatprep.subr.bf16.mxu0 0
    %568 = vmatpush1.bf16.msra.mxu0 %v439
    %569 = vmatprep.subr.bf16.mxu0 0
    %570 = vmatpush1.bf16.msra.mxu0 %v440
    %571 = vmatprep.subr.bf16.mxu0 0
    %572 = vmatpush1.bf16.msra.mxu0 %v441
    %573 = vmatprep.subr.bf16.mxu0 0
    %574 = vmatpush1.bf16.msra.mxu0 %v442
    %575 = vmatprep.subr.bf16.mxu0 0
    %576 = vmatpush1.bf16.msra.mxu0 %v443
    %577 = vmatprep.subr.bf16.mxu0 0
    %578 = vmatpush1.bf16.msra.mxu0 %v444
    %579 = vmatprep.subr.bf16.mxu0 0
    %580 = vmatpush1.bf16.msra.mxu0 %v445
    %581 = vmatprep.subr.bf16.mxu0 0
    %582 = vmatpush1.bf16.msra.mxu0 %v446
    %583 = vmatprep.subr.bf16.mxu0 0
    %584 = vmatpush1.bf16.msra.mxu0 %v447
    %585 = vmatprep.subr.bf16.mxu0 0
    %586 = vmatpush1.bf16.msra.mxu0 %v448
    %587 = vmatprep.subr.bf16.mxu0 0
    %588 = vmatpush1.bf16.msra.mxu0 %v449
    %589 = vmatprep.subr.bf16.mxu0 0
    %590 = vmatpush1.bf16.msra.mxu0 %v450
    %591 = vmatprep.subr.bf16.mxu0 0
    %592 = vmatpush1.bf16.msra.mxu0 %v451
    %593 = vmatprep.subr.bf16.mxu0 0
    %594 = vmatpush1.bf16.msra.mxu0 %v452
    %595 = vmatprep.subr.bf16.mxu0 0
    %596 = vmatpush1.bf16.msra.mxu0 %v453
    %597 = vmatprep.subr.bf16.mxu0 0
    %598 = vmatpush1.bf16.msra.mxu0 %v454
    %599 = vmatprep.mubr.bf16.mxu0 %v41
    %600 = vmatmul.mubr.bf16.gmra.mrb[0].mxu0 %v40
    %v601 = vpop.f32.mrb[0].mxu0
    %v602 = vadd.f32 %v181, %v601
    %v603 = vpop.f32.mrb[0].mxu0
    %v604 = vpop.f32.mrb[0].mxu0
    %v605 = vpop.f32.mrb[0].mxu0
    %606 = vdwg.mxu0
    %607 = vmatprep.subr.bf16.mxu0 0
    %608 = vmatpush1.bf16.msra.mxu0 %v455
    %609 = vmatprep.subr.bf16.mxu0 0
    %610 = vmatpush1.bf16.msra.mxu0 %v456
    %611 = vmatprep.subr.bf16.mxu0 0
    %612 = vmatpush1.bf16.msra.mxu0 %v457
    %613 = vmatprep.subr.bf16.mxu0 0
    %614 = vmatpush1.bf16.msra.mxu0 %v458
    %615 = vmatprep.subr.bf16.mxu0 0
    %616 = vmatpush1.bf16.msra.mxu0 %v459
    %617 = vmatprep.subr.bf16.mxu0 0
    %618 = vmatpush1.bf16.msra.mxu0 %v460
    %619 = vmatprep.subr.bf16.mxu0 0
    %620 = vmatpush1.bf16.msra.mxu0 %v461
    %621 = vmatprep.subr.bf16.mxu0 0
    %622 = vmatpush1.bf16.msra.mxu0 %v462
    %623 = vmatprep.subr.bf16.mxu0 0
    %624 = vmatpush1.bf16.msra.mxu0 %v463
    %625 = vmatprep.subr.bf16.mxu0 0
    %626 = vmatpush1.bf16.msra.mxu0 %v464
    %627 = vmatprep.subr.bf16.mxu0 0
    %628 = vmatpush1.bf16.msra.mxu0 %v465
    %629 = vmatprep.subr.bf16.mxu0 0
    %630 = vmatpush1.bf16.msra.mxu0 %v466
    %631 = vmatprep.subr.bf16.mxu0 0
    %632 = vmatpush1.bf16.msra.mxu0 %v467
    %633 = vmatprep.subr.bf16.mxu0 0
    %634 = vmatpush1.bf16.msra.mxu0 %v468
    %635 = vmatprep.subr.bf16.mxu0 0
    %636 = vmatpush1.bf16.msra.mxu0 %v469
    %637 = vmatprep.subr.bf16.mxu0 0
    %638 = vmatpush1.bf16.msra.mxu0 %v470
    %639 = vmatprep.mubr.bf16.mxu0 %v43
    %640 = vmatmul.mubr.bf16.gmra.mrb[0].mxu0 %v42
    %v641 = vpop.f32.mrb[0].mxu0
    %v642 = vadd.f32 %v602, %v641
    %v643 = vpop.f32.mrb[0].mxu0
    %v644 = vpop.f32.mrb[0].mxu0
    %v645 = vpop.f32.mrb[0].mxu0
    %646 = vdwg.mxu0
    %647 = vmatprep.subr.bf16.mxu0 0
    %648 = vmatpush1.bf16.msra.mxu0 %v471
    %649 = vmatprep.subr.bf16.mxu0 0
    %650 = vmatpush1.bf16.msra.mxu0 %v472
    %651 = vmatprep.subr.bf16.mxu0 0
    %652 = vmatpush1.bf16.msra.mxu0 %v473
    %653 = vmatprep.subr.bf16.mxu0 0
    %654 = vmatpush1.bf16.msra.mxu0 %v474
    %655 = vmatprep.subr.bf16.mxu0 0
    %656 = vmatpush1.bf16.msra.mxu0 %v475
    %657 = vmatprep.subr.bf16.mxu0 0
    %658 = vmatpush1.bf16.msra.mxu0 %v476
    %659 = vmatprep.subr.bf16.mxu0 0
    %660 = vmatpush1.bf16.msra.mxu0 %v477
    %661 = vmatprep.subr.bf16.mxu0 0
    %662 = vmatpush1.bf16.msra.mxu0 %v478
    %663 = vmatprep.subr.bf16.mxu0 0
    %664 = vmatpush1.bf16.msra.mxu0 %v479
    %665 = vmatprep.subr.bf16.mxu0 0
    %666 = vmatpush1.bf16.msra.mxu0 %v480
    %667 = vmatprep.subr.bf16.mxu0 0
    %668 = vmatpush1.bf16.msra.mxu0 %v481
    %669 = vmatprep.subr.bf16.mxu0 0
    %670 = vmatpush1.bf16.msra.mxu0 %v482
    %671 = vmatprep.subr.bf16.mxu0 0
    %672 = vmatpush1.bf16.msra.mxu0 %v483
    %673 = vmatprep.subr.bf16.mxu0 0
    %674 = vmatpush1.bf16.msra.mxu0 %v484
    %675 = vmatprep.subr.bf16.mxu0 0
    %676 = vmatpush1.bf16.msra.mxu0 %v485
    %677 = vmatprep.subr.bf16.mxu0 0
    %678 = vmatpush1.bf16.msra.mxu0 %v486
    %679 = vmatprep.mubr.bf16.mxu0 %v45
    %680 = vmatmul.mubr.bf16.gmra.mrb[0].mxu0 %v44
    %v681 = vpop.f32.mrb[0].mxu0
    %v682 = vadd.f32 %v642, %v681
    %v683 = vpop.f32.mrb[0].mxu0
    %v684 = vpop.f32.mrb[0].mxu0
    %v685 = vpop.f32.mrb[0].mxu0
    %686 = vdwg.mxu0
    %687 = vmatprep.subr.bf16.mxu0 0
    %688 = vmatpush1.bf16.msra.mxu0 %v487
    %689 = vmatprep.subr.bf16.mxu0 0
    %690 = vmatpush1.bf16.msra.mxu0 %v488
    %691 = vmatprep.subr.bf16.mxu0 0
    %692 = vmatpush1.bf16.msra.mxu0 %v489
    %693 = vmatprep.subr.bf16.mxu0 0
    %694 = vmatpush1.bf16.msra.mxu0 %v490
    %695 = vmatprep.subr.bf16.mxu0 0
    %696 = vmatpush1.bf16.msra.mxu0 %v491
    %697 = vmatprep.subr.bf16.mxu0 0
    %698 = vmatpush1.bf16.msra.mxu0 %v492
    %699 = vmatprep.subr.bf16.mxu0 0
    %700 = vmatpush1.bf16.msra.mxu0 %v493
    %701 = vmatprep.subr.bf16.mxu0 0
    %702 = vmatpush1.bf16.msra.mxu0 %v494
    %703 = vmatprep.subr.bf16.mxu0 0
    %704 = vmatpush1.bf16.msra.mxu0 %v495
    %705 = vmatprep.subr.bf16.mxu0 0
    %706 = vmatpush1.bf16.msra.mxu0 %v496
    %707 = vmatprep.subr.bf16.mxu0 0
    %708 = vmatpush1.bf16.msra.mxu0 %v497
    %709 = vmatprep.subr.bf16.mxu0 0
    %710 = vmatpush1.bf16.msra.mxu0 %v498
    %711 = vmatprep.subr.bf16.mxu0 0
    %712 = vmatpush1.bf16.msra.mxu0 %v499
    %713 = vmatprep.subr.bf16.mxu0 0
    %714 = vmatpush1.bf16.msra.mxu0 %v500
    %715 = vmatprep.subr.bf16.mxu0 0
    %716 = vmatpush1.bf16.msra.mxu0 %v501
    %717 = vmatprep.subr.bf16.mxu0 0
    %718 = vmatpush1.bf16.msra.mxu0 %v502
    %719 = vmatprep.mubr.bf16.mxu0 %v47
    %720 = vmatmul.mubr.bf16.gmra.mrb[0].mxu0 %v46
    %v721 = vpop.f32.mrb[0].mxu0
    %v722 = vadd.f32 %v682, %v721
    %v723 = vpop.f32.mrb[0].mxu0
    %v724 = vpop.f32.mrb[0].mxu0
    %v725 = vpop.f32.mrb[0].mxu0
    %726 = vdwg.mxu0
    %v727 = vmax.f32 %v722, 0.0
    %v728 = vld [vmem:[%s3] sm:$0xf]
    %v729 = vld [vmem:[%s3 + $0x4] sm:$0xf]
    %v730 = vld [vmem:[%s3 + $0x8] sm:$0xf]
    %v731 = vld [vmem:[%s3 + $0xc] sm:$0xf]
    %v732 = vld [vmem:[%s3 + $0x10] sm:$0xf]
    %v733 = vld [vmem:[%s3 + $0x14] sm:$0xf]
    %v734 = vld [vmem:[%s3 + $0x18] sm:$0xf]
    %v735 = vld [vmem:[%s3 + $0x1c] sm:$0xf]
    %v736 = vld [vmem:[%s3 + $0x20] sm:$0xf]
    %v737 = vld [vmem:[%s3 + $0x24] sm:$0xf]
    %v738 = vld [vmem:[%s3 + $0x28] sm:$0xf]
    %v739 = vld [vmem:[%s3 + $0x2c] sm:$0xf]
    %v740 = vld [vmem:[%s3 + $0x30] sm:$0xf]
    %v741 = vld [vmem:[%s3 + $0x34] sm:$0xf]
    %v742 = vld [vmem:[%s3 + $0x38] sm:$0xf]
    %v743 = vld [vmem:[%s3 + $0x3c] sm:$0xf]
    %v744 = vpack.c.bf16 %v727, %v727
    %v761 = vunpack.c.l.b16 %v728
    %v762 = vunpack.c.l.b16 %v729
    %v763 = vunpack.c.l.b16 %v730
    %v764 = vunpack.c.l.b16 %v731
    %v765 = vunpack.c.l.b16 %v732
    %v766 = vunpack.c.l.b16 %v733
    %v767 = vunpack.c.l.b16 %v734
    %v768 = vunpack.c.l.b16 %v735
    %v769 = vunpack.c.l.b16 %v736
    %v770 = vunpack.c.l.b16 %v737
    %v771 = vunpack.c.l.b16 %v738
    %v772 = vunpack.c.l.b16 %v739
    %v773 = vunpack.c.l.b16 %v740
    %v774 = vunpack.c.l.b16 %v741
    %v775 = vunpack.c.l.b16 %v742
    %v776 = vunpack.c.l.b16 %v743
    %v777 = vpack.c.b16 %v762, %v761
    %v778 = vpack.c.b16 %v764, %v763
    %v779 = vpack.c.b16 %v766, %v765
    %v780 = vpack.c.b16 %v768, %v767
    %v781 = vpack.c.b16 %v770, %v769
    %v782 = vpack.c.b16 %v772, %v771
    %v783 = vpack.c.b16 %v774, %v773
    %v784 = vpack.c.b16 %v776, %v775
    %793 = vmatprep.subr.bf16.mxu0 0
    %794 = vmatpush1.bf16.msra.mxu0 %v777
    %795 = vmatprep.subr.bf16.mxu0 0
    %796 = vmatpush1.bf16.msra.mxu0 %v778
    %797 = vmatprep.subr.bf16.mxu0 0
    %798 = vmatpush1.bf16.msra.mxu0 %v779
    %799 = vmatprep.subr.bf16.mxu0 0
    %800 = vmatpush1.bf16.msra.mxu0 %v780
    %801 = vmatprep.subr.bf16.mxu0 0
    %802 = vmatpush1.bf16.msra.mxu0 %v781
    %803 = vmatprep.subr.bf16.mxu0 0
    %804 = vmatpush1.bf16.msra.mxu0 %v782
    %805 = vmatprep.subr.bf16.mxu0 0
    %806 = vmatpush1.bf16.msra.mxu0 %v783
    %807 = vmatprep.subr.bf16.mxu0 0
    %808 = vmatpush1.bf16.msra.mxu0 %v784
    %809 = vmatprep.subr.bf16.mxu0 0
    %810 = vmatpush1.bf16.msra.mxu0 0
    %811 = vmatprep.subr.bf16.mxu0 0
    %812 = vmatpush1.bf16.msra.mxu0 0
    %813 = vmatprep.subr.bf16.mxu0 0
    %814 = vmatpush1.bf16.msra.mxu0 0
    %815 = vmatprep.subr.bf16.mxu0 0
    %816 = vmatpush1.bf16.msra.mxu0 0
    %817 = vmatprep.subr.bf16.mxu0 0
    %818 = vmatpush1.bf16.msra.mxu0 0
    %819 = vmatprep.subr.bf16.mxu0 0
    %820 = vmatpush1.bf16.msra.mxu0 0
    %821 = vmatprep.subr.bf16.mxu0 0
    %822 = vmatpush1.bf16.msra.mxu0 0
    %823 = vmatprep.subr.bf16.mxu0 0
    %824 = vmatpush1.bf16.msra.mxu0 0
    %825 = vmatprep.mubr.bf16.mxu0 0
    %826 = vmatmul.mubr.bf16.gmra.mrb[0].mxu0 %v744
    %v827 = vpop.f32.mrb[0].mxu0
    %v828 = vadd.f32 0.0, %v827
    %v829 = vpop.f32.mrb[0].mxu0
    %v830 = vpop.f32.mrb[0].mxu0
    %v831 = vpop.f32.mrb[0].mxu0
    %832 = vdwg.mxu0
    %v833 = vadd.f32 %v722, %v828
    %v834 = vmax.f32 %v833, 0.0
    %v835 = vpack.c.bf16 %v834, %v834
    %836 = vmatprep.subr.bf16.mxu0 0
    %837 = vmatpush1.bf16.msra.mxu0 %v777
    %838 = vmatprep.subr.bf16.mxu0 0
    %839 = vmatpush1.bf16.msra.mxu0 %v778
    %840 = vmatprep.subr.bf16.mxu0 0
    %841 = vmatpush1.bf16.msra.mxu0 %v779
    %842 = vmatprep.subr.bf16.mxu0 0
    %843 = vmatpush1.bf16.msra.mxu0 %v780
    %844 = vmatprep.subr.bf16.mxu0 0
    %845 = vmatpush1.bf16.msra.mxu0 %v781
    %846 = vmatprep.subr.bf16.mxu0 0
    %847 = vmatpush1.bf16.msra.mxu0 %v782
    %848 = vmatprep.subr.bf16.mxu0 0
    %849 = vmatpush1.bf16.msra.mxu0 %v783
    %850 = vmatprep.subr.bf16.mxu0 0
    %851 = vmatpush1.bf16.msra.mxu0 %v784
    %852 = vmatprep.subr.bf16.mxu0 0
    %853 = vmatpush1.bf16.msra.mxu0 0
    %854 = vmatprep.subr.bf16.mxu0 0
    %855 = vmatpush1.bf16.msra.mxu0 0
    %856 = vmatprep.subr.bf16.mxu0 0
    %857 = vmatpush1.bf16.msra.mxu0 0
    %858 = vmatprep.subr.bf16.mxu0 0
    %859 = vmatpush1.bf16.msra.mxu0 0
    %860 = vmatprep.subr.bf16.mxu0 0
    %861 = vmatpush1.bf16.msra.mxu0 0
    %862 = vmatprep.subr.bf16.mxu0 0
    %863 = vmatpush1.bf16.msra.mxu0 0
    %864 = vmatprep.subr.bf16.mxu0 0
    %865 = vmatpush1.bf16.msra.mxu0 0
    %866 = vmatprep.subr.bf16.mxu0 0
    %867 = vmatpush1.bf16.msra.mxu0 0
    %868 = vmatprep.mubr.bf16.mxu0 0
    %869 = vmatmul.mubr.bf16.gmra.mrb[0].mxu0 %v835
    %v870 = vpop.f32.mrb[0].mxu0
    %v871 = vadd.f32 0.0, %v870
    %v872 = vpop.f32.mrb[0].mxu0
    %v873 = vpop.f32.mrb[0].mxu0
    %v874 = vpop.f32.mrb[0].mxu0
    %875 = vdwg.mxu0
    %v876 = vadd.f32 %v722, %v871
    %v877 = vmax.f32 %v876, 0.0
    %v878 = vpack.c.bf16 %v877, %v877
    %879 = vmatprep.subr.bf16.mxu0 0
    %880 = vmatpush1.bf16.msra.mxu0 %v777
    %881 = vmatprep.subr.bf16.mxu0 0
    %882 = vmatpush1.bf16.msra.mxu0 %v778
    %883 = vmatprep.subr.bf16.mxu0 0
    %884 = vmatpush1.bf16.msra.mxu0 %v779
    %885 = vmatprep.subr.bf16.mxu0 0
    %886 = vmatpush1.bf16.msra.mxu0 %v780
    %887 = vmatprep.subr.bf16.mxu0 0
    %888 = vmatpush1.bf16.msra.mxu0 %v781
    %889 = vmatprep.subr.bf16.mxu0 0
    %890 = vmatpush1.bf16.msra.mxu0 %v782
    %891 = vmatprep.subr.bf16.mxu0 0
    %892 = vmatpush1.bf16.msra.mxu0 %v783
    %893 = vmatprep.subr.bf16.mxu0 0
    %894 = vmatpush1.bf16.msra.mxu0 %v784
    %895 = vmatprep.subr.bf16.mxu0 0
    %896 = vmatpush1.bf16.msra.mxu0 0
    %897 = vmatprep.subr.bf16.mxu0 0
    %898 = vmatpush1.bf16.msra.mxu0 0
    %899 = vmatprep.subr.bf16.mxu0 0
    %900 = vmatpush1.bf16.msra.mxu0 0
    %901 = vmatprep.subr.bf16.mxu0 0
    %902 = vmatpush1.bf16.msra.mxu0 0
    %903 = vmatprep.subr.bf16.mxu0 0
    %904 = vmatpush1.bf16.msra.mxu0 0
    %905 = vmatprep.subr.bf16.mxu0 0
    %906 = vmatpush1.bf16.msra.mxu0 0
    %907 = vmatprep.subr.bf16.mxu0 0
    %908 = vmatpush1.bf16.msra.mxu0 0
    %909 = vmatprep.subr.bf16.mxu0 0
    %910 = vmatpush1.bf16.msra.mxu0 0
    %911 = vmatprep.mubr.bf16.mxu0 0
    %912 = vmatmul.mubr.bf16.gmra.mrb[0].mxu0 %v878
    %v913 = vpop.f32.mrb[0].mxu0
    %v914 = vadd.f32 0.0, %v913
    %v915 = vpop.f32.mrb[0].mxu0
    %v916 = vpop.f32.mrb[0].mxu0
    %v917 = vpop.f32.mrb[0].mxu0
    %918 = vdwg.mxu0
    %v919 = vadd.f32 %v722, %v914
    %v920 = vmax.f32 %v919, 0.0
    %921 = vst [vmem:[%s4] sm:$0xff] %v920
    // Predicated region
    $region22: #{lista_encoder_forward.1} parent=1 // pred_check
      _
    $region23: #{lista_encoder_forward.1} parent=1 // pred_check_branch
      %923 = sbr.rel (0) target = $region25
    $region24: #{lista_encoder_forward.1} parent=1 // pred_region
      _
    $region25: #{lista_encoder_forward.1} parent=1 // pred_fallthru
      _
    // Predicated region
    $region26: #{lista_encoder_forward.1} parent=1 // pred_check
      _
    $region27: #{lista_encoder_forward.1} parent=1 // pred_check_branch
      %925 = sbr.rel (0) target = $region29
    $region28: #{lista_encoder_forward.1} parent=1 // pred_region
      _
    $region29: #{lista_encoder_forward.1} parent=1 // pred_fallthru
      _
    %926 = vsyncpa [#allocation3], 1

</llo_original>
